<compile_context>
chip_gen: v6e
topology: v6e:2x2x1
jax: 0.10.0
libtpu: 0.0.40
codegen_flags: <defaults>
</compile_context>

<pallas_src>
import functools
import math

import jax
import jax.numpy as jnp
from jax.experimental import pallas as pl
from jax.experimental.pallas import tpu as pltpu

_INV_SQRT2 = 1.0 / math.sqrt(2.0)


# --------------------------------------------------------------------------
# Kernel
# --------------------------------------------------------------------------
def _time2vec_kernel(f_ref, w1_ref, b1_ref, w2_ref, b2_ref, o_ref, *, exact_gelu):
    # f_ref:  (TMG, G*3)   packed feature row-groups
    # w1_ref: (G*3, G*D)   block-diagonal W1^T
    # b1_ref: (1, G*D)     tiled bias1
    # w2_ref: (G*D, G*D)   block-diagonal W2^T
    # b2_ref: (1, G*D)     tiled bias2
    # o_ref:  (TMG, G*D)   packed output row-groups
    h = jnp.dot(f_ref[...], w1_ref[...], preferred_element_type=jnp.float32)
    h = h + b1_ref[...].astype(jnp.float32)

    if exact_gelu:
        # Exact (erf) GELU -- matches PyTorch nn.GELU() default.
        g = 0.5 * h * (1.0 + jax.lax.erf(h * _INV_SQRT2))
    else:
        # Cheaper tanh GELU: goes to the EUP slot (otherwise idle here).
        g = jax.nn.gelu(h, approximate=True)

    # NOTE: if weights are bf16 this downcasts the f32 GELU output before the
    # second matmul (standard mixed-precision convention; f32 weights -> no-op).
    out = jnp.dot(g.astype(w2_ref.dtype), w2_ref[...],
                  preferred_element_type=jnp.float32)
    out = out + b2_ref[...].astype(jnp.float32)
    o_ref[...] = out.astype(o_ref.dtype)


# --------------------------------------------------------------------------
# Parameter packing (do once per parameter set, not per forward call)
# --------------------------------------------------------------------------
def _block_diag(w, g):
    """(a, b) -> (g*a, g*b) block-diagonal with g copies of w."""
    a, b = w.shape
    eye = jnp.eye(g, dtype=w.dtype)
    return (eye[:, None, :, None] * w[None, :, None, :]).reshape(g * a, g * b)


def _target_lane_width():
    """256 for v6e/v7x (2x256 MXU); 128 for v5e (4x128 MXU)."""
    try:
        info = pltpu.get_tpu_info()
        if "v5" in str(getattr(info, "chip_version", "")).lower():
            return 128
    except Exception:
        pass
    return 256


def pick_group(embedding_dim):
    """Rows packed per lane group so the packed width fills the MXU/vregs."""
    if embedding_dim >= 128:
        return 1
    return max(1, _target_lane_width() // embedding_dim)


def prepare_time_encoder_params(w1, b1, w2, b2, *, group):
    """Pack PyTorch-layout params (w1:(D,3), b1:(D,), w2:(D,D), b2:(D,))."""
    D = w1.shape[0]
    w1p = _block_diag(w1.T, group)                  # (G*3, G*D)
    w2p = _block_diag(w2.T, group)                  # (G*D, G*D)
    b1p = jnp.tile(b1.reshape(1, D), (1, group))    # (1, G*D)
    b2p = jnp.tile(b2.reshape(1, D), (1, group))    # (1, G*D)
    return w1p, b1p, w2p, b2p


# --------------------------------------------------------------------------
# Feature construction (tiny: 3 floats/row; kept in plain JAX)
# --------------------------------------------------------------------------
def _time_features(times):
    """(B, T) -> (B, T, 3) = stack([times, relative_pos, time_deltas], -1)."""
    window_start = times[:, :1]
    window_duration = times[:, -1:] - times[:, :1]
    relative_pos = (times - window_start) / (window_duration + 1e-8)
    time_deltas = jnp.diff(times, axis=1)
    time_deltas = jnp.concatenate([time_deltas, time_deltas[:, -1:]], axis=1)
    return jnp.stack([times, relative_pos, time_deltas], axis=-1)


# --------------------------------------------------------------------------
# Forward pass
# --------------------------------------------------------------------------
def time_encoder_forward_packed(times, packed_params, *, D, group,
                                tile_rows=1024, exact_gelu=True):
    """times: (B, T); packed_params from prepare_time_encoder_params."""
    w1p, b1p, w2p, b2p = packed_params
    B, T = times.shape
    G = group
    M = B * T

    feats = _time_features(times).reshape(M, 3)

    # Pad the row axis so it packs into whole G-row groups.
    Mpad = pl.cdiv(M, G) * G
    if Mpad != M:
        feats = jnp.pad(feats, ((0, Mpad - M), (0, 0)))
    Mg = Mpad // G
    feats_packed = feats.reshape(Mg, G * 3)
    G3, GD = G * 3, G * D

    # Padding-aware VMEM budget: physical tile bytes (last dim padded to a
    # multiple of 128 lanes), doubled for the pipeline's double buffering.
    itemsize = max(jnp.dtype(times.dtype).itemsize, 4)  # intermediates are f32
    lane = 128

    def _padded_row_bytes(cols):
        return pl.cdiv(cols, lane) * lane * itemsize

    per_row = 2 * (_padded_row_bytes(G3) + _padded_row_bytes(GD))
    budget_rows = max(8, ((16 * 1024 * 1024) // per_row) // 8 * 8)
    tm = min(tile_rows, budget_rows)
    if tm >= Mg:
        tm = Mg                                # single block spans the full axis
    else:
        tm = max(8, (tm // 8) * 8)             # blocked sublane dim: multiple of 8
    grid = (pl.cdiv(Mg, tm),)

    kernel = functools.partial(_time2vec_kernel, exact_gelu=exact_gelu)

    out = pl.pallas_call(
        kernel,
        out_shape=jax.ShapeDtypeStruct((Mg, GD), times.dtype),
        grid_spec=pltpu.PrefetchScalarGridSpec(
            num_scalar_prefetch=0,
            grid=grid,
            in_specs=[
                pl.BlockSpec((tm, G3), lambda i: (i, 0)),   # packed feature rows
                pl.BlockSpec((G3, GD), lambda i: (0, 0)),   # weights: VMEM-resident
                pl.BlockSpec((1, GD), lambda i: (0, 0)),
                pl.BlockSpec((GD, GD), lambda i: (0, 0)),
                pl.BlockSpec((1, GD), lambda i: (0, 0)),
            ],
            out_specs=pl.BlockSpec((tm, GD), lambda i: (i, 0)),
        ),
        compiler_params=pltpu.CompilerParams(
            dimension_semantics=("parallel",),  # independent row tiles
            vmem_limit_bytes=32 * 1024 * 1024,
        ),
    )(feats_packed, w1p, b1p, w2p, b2p)

    # (Mg, G*D) -> (Mpad, D) is a pure row-major metadata reshape.
    out = out.reshape(Mpad, D)
    if Mpad != M:
        out = out[:M]
    return out.reshape(B, T, D)


def time_encoder_forward(times, w1, b1, w2, b2, *, tile_rows=1024,
                         exact_gelu=True, group=None):
    """Convenience wrapper (packs params per call; prefer the packed API)."""
    D = w1.shape[0]
    assert w1.shape == (D, 3) and w2.shape == (D, D)
    if group is None:
        group = pick_group(D)
    packed = prepare_time_encoder_params(w1, b1, w2, b2, group=group)
    return time_encoder_forward_packed(times, packed, D=D, group=group,
                                       tile_rows=tile_rows, exact_gelu=exact_gelu)


# --------------------------------------------------------------------------
# Pure-JAX reference (mirrors the PyTorch module)
# --------------------------------------------------------------------------
def _reference(times, w1, b1, w2, b2):
    f = _time_features(times)
    h = jnp.einsum("btf,df->btd", f, w1) + b1
    h = 0.5 * h * (1.0 + jax.lax.erf(h * _INV_SQRT2))
    return jnp.einsum("btd,ed->bte", h, w2) + b2


if __name__ == "__main__":
    key = jax.random.PRNGKey(0)
    k_t1, k_t2, k_t3, kw1, kb1, kw2, kb2 = jax.random.split(key, 7)

    D = 32
    w1 = 0.5 * jax.random.normal(kw1, (D, 3), jnp.float32)
    b1 = 0.1 * jax.random.normal(kb1, (D,), jnp.float32)
    w2 = (1.0 / math.sqrt(D)) * jax.random.normal(kw2, (D, D), jnp.float32)
    b2 = 0.1 * jax.random.normal(kb2, (D,), jnp.float32)

    # Pack weights once, reuse across forward calls.
    group = pick_group(D)
    packed = prepare_time_encoder_params(w1, b1, w2, b2, group=group)

    # 1) Small shape implied by the module: batch=2, seq=16 monotone timestamps.
    times_small = jnp.cumsum(
        jax.random.uniform(k_t1, (2, 16), jnp.float32, 0.1, 1.0), axis=1)
    y = time_encoder_forward_packed(times_small, packed, D=D, group=group)
    jax.block_until_ready(y)
    y_ref = _reference(times_small, w1, b1, w2, b2)
    assert y.shape == (2, 16, D)
    assert jnp.allclose(y, y_ref, atol=1e-3, rtol=1e-4), "small-shape mismatch"

    # 2) Larger shape with a deliberately small tile to exercise a multi-step
    #    grid and a masked partial last block (M=1000 -> Mg=125, tile 64).
    times_big = jnp.cumsum(
        jax.random.uniform(k_t2, (5, 200), jnp.float32, 0.1, 1.0), axis=1)
    y2 = time_encoder_forward_packed(times_big, packed, D=D, group=group,
                                     tile_rows=64)
    jax.block_until_ready(y2)
    y2_ref = _reference(times_big, w1, b1, w2, b2)
    assert y2.shape == (5, 200, D)
    assert jnp.allclose(y2, y2_ref, atol=1e-3, rtol=1e-4), "tiled-shape mismatch"

    # 3) Shape whose row count is not a multiple of the packing group
    #    (exercises the row-group padding + final slice path).
    times_odd = jnp.cumsum(
        jax.random.uniform(k_t3, (3, 17), jnp.float32, 0.1, 1.0), axis=1)
    y3 = time_encoder_forward_packed(times_odd, packed, D=D, group=group)
    jax.block_until_ready(y3)
    y3_ref = _reference(times_odd, w1, b1, w2, b2)
    assert y3.shape == (3, 17, D)
    assert jnp.allclose(y3, y3_ref, atol=1e-3, rtol=1e-4), "padded-shape mismatch"

    print("KERNEL_OK")
</pallas_src>

<mosaic_0001>
module attributes {stable_mosaic.version = 11 : i64} {
  func.func @_time2vec_kernel(%arg0: i32, %arg1: memref<4x24xf32, #tpu.memory_space<vmem>>, %arg2: memref<24x256xf32, #tpu.memory_space<vmem>>, %arg3: memref<1x256xf32, #tpu.memory_space<vmem>>, %arg4: memref<256x256xf32, #tpu.memory_space<vmem>>, %arg5: memref<1x256xf32, #tpu.memory_space<vmem>>, %arg6: memref<4x256xf32, #tpu.memory_space<vmem>>) attributes {dimension_semantics = [#tpu.dimension_semantics<parallel>], iteration_bounds = array<i64: 1>, scalar_prefetch = 0 : i64, scratch_operands = 0 : i64, tpu.core_type = #tpu.core_type<tc>, window_params = [{transform_indices = @transform_0, window_bounds = array<i64: 4, 24>}, {pipeline_mode = #tpu.pipeline_mode<synchronous>, transform_indices = @transform_1, window_bounds = array<i64: 24, 256>}, {pipeline_mode = #tpu.pipeline_mode<synchronous>, transform_indices = @transform_2, window_bounds = array<i64: 1, 256>}, {pipeline_mode = #tpu.pipeline_mode<synchronous>, transform_indices = @transform_3, window_bounds = array<i64: 256, 256>}, {pipeline_mode = #tpu.pipeline_mode<synchronous>, transform_indices = @transform_4, window_bounds = array<i64: 1, 256>}, {transform_indices = @transform_5, window_bounds = array<i64: 4, 256>}]} {
    %c0 = arith.constant 0 : index
    %c0_0 = arith.constant 0 : index
    %0 = vector.load %arg1[%c0, %c0_0] : memref<4x24xf32, #tpu.memory_space<vmem>>, vector<4x24xf32>
    %c0_1 = arith.constant 0 : index
    %c0_2 = arith.constant 0 : index
    %1 = vector.load %arg2[%c0_1, %c0_2] : memref<24x256xf32, #tpu.memory_space<vmem>>, vector<24x256xf32>
    %cst = arith.constant dense<0.000000e+00> : vector<4x256xf32>
    %2 = tpu.matmul %0, %1, %cst {dimension_numbers = #tpu.dot_dimension_numbers<[1], [0], [0], [1], [0, 0, 1, 1], [], []>} : vector<4x24xf32>, vector<24x256xf32>, vector<4x256xf32> -> vector<4x256xf32>
    %c0_3 = arith.constant 0 : index
    %c0_4 = arith.constant 0 : index
    %3 = vector.load %arg3[%c0_3, %c0_4] : memref<1x256xf32, #tpu.memory_space<vmem>>, vector<1x256xf32>
    %4 = vector.broadcast %3 : vector<1x256xf32> to vector<4x256xf32>
    %5 = arith.addf %2, %4 : vector<4x256xf32>
    %cst_5 = arith.constant 5.000000e-01 : f32
    %6 = vector.broadcast %cst_5 : f32 to vector<4x256xf32>
    %7 = arith.mulf %6, %5 : vector<4x256xf32>
    %cst_6 = arith.constant 0.707106769 : f32
    %8 = vector.broadcast %cst_6 : f32 to vector<4x256xf32>
    %9 = arith.mulf %5, %8 : vector<4x256xf32>
    %10 = math.erf %9 : vector<4x256xf32>
    %cst_7 = arith.constant 1.000000e+00 : f32
    %11 = vector.broadcast %cst_7 : f32 to vector<4x256xf32>
    %12 = arith.addf %11, %10 : vector<4x256xf32>
    %13 = arith.mulf %7, %12 : vector<4x256xf32>
    %c0_8 = arith.constant 0 : index
    %c0_9 = arith.constant 0 : index
    %14 = vector.load %arg4[%c0_8, %c0_9] : memref<256x256xf32, #tpu.memory_space<vmem>>, vector<256x256xf32>
    %cst_10 = arith.constant dense<0.000000e+00> : vector<4x256xf32>
    %15 = tpu.matmul %13, %14, %cst_10 {dimension_numbers = #tpu.dot_dimension_numbers<[1], [0], [0], [1], [0, 0, 1, 1], [], []>} : vector<4x256xf32>, vector<256x256xf32>, vector<4x256xf32> -> vector<4x256xf32>
    %c0_11 = arith.constant 0 : index
    %c0_12 = arith.constant 0 : index
    %16 = vector.load %arg5[%c0_11, %c0_12] : memref<1x256xf32, #tpu.memory_space<vmem>>, vector<1x256xf32>
    %17 = vector.broadcast %16 : vector<1x256xf32> to vector<4x256xf32>
    %18 = arith.addf %15, %17 : vector<4x256xf32>
    %c0_13 = arith.constant 0 : index
    %c0_14 = arith.constant 0 : index
    %19 = vector.load %arg6[%c0_13, %c0_14] : memref<4x256xf32, #tpu.memory_space<vmem>>, vector<4x256xf32>
    tpu.vector_store %arg6[%c0_13, %c0_14], %18 {strides = array<i32>} : memref<4x256xf32, #tpu.memory_space<vmem>>, vector<4x256xf32>,
    return
  }
  func.func @transform_0(%arg0: i32) -> (i32, i32) {
    %c0_i32 = arith.constant 0 : i32
    %c0_i32_0 = arith.constant 0 : i32
    return %arg0, %c0_i32 : i32, i32
  }
  func.func @transform_1(%arg0: i32) -> (i32, i32) {
    %c0_i32 = arith.constant 0 : i32
    %c0_i32_0 = arith.constant 0 : i32
    %c0_i32_1 = arith.constant 0 : i32
    return %c0_i32, %c0_i32_0 : i32, i32
  }
  func.func @transform_2(%arg0: i32) -> (i32, i32) {
    %c0_i32 = arith.constant 0 : i32
    %c0_i32_0 = arith.constant 0 : i32
    %c0_i32_1 = arith.constant 0 : i32
    return %c0_i32, %c0_i32_0 : i32, i32
  }
  func.func @transform_3(%arg0: i32) -> (i32, i32) {
    %c0_i32 = arith.constant 0 : i32
    %c0_i32_0 = arith.constant 0 : i32
    %c0_i32_1 = arith.constant 0 : i32
    return %c0_i32, %c0_i32_0 : i32, i32
  }
  func.func @transform_4(%arg0: i32) -> (i32, i32) {
    %c0_i32 = arith.constant 0 : i32
    %c0_i32_0 = arith.constant 0 : i32
    %c0_i32_1 = arith.constant 0 : i32
    return %c0_i32, %c0_i32_0 : i32, i32
  }
  func.func @transform_5(%arg0: i32) -> (i32, i32) {
    %c0_i32 = arith.constant 0 : i32
    %c0_i32_0 = arith.constant 0 : i32
    return %arg0, %c0_i32 : i32, i32
  }
}

</mosaic_0001>

<llo_original>
// kernel: tpu_custom_call.1
$region0: #{tpu_custom_call.1}
  #allocation0 [shape = 'u32[]', space=smem, size = 0x4, offset = 0x4, fixed_abs, tag = 'smem constant byte address 0x4 - core index']
  #allocation1 [shape = 'u32[144,128]{1,0:T(1,128)}', space=vmem, size = 0x12000, scoped, tag = 'internal scratch']
  %s0 = inlined_call_operand.hbm [shape: f32[4,24], index: 0, kind: input, shape index: {}]
  %s1 = inlined_call_operand.hbm [shape: f32[24,256], index: 1, kind: input, shape index: {}]
  %s2 = inlined_call_operand.vmem [shape: f32[1,256], index: 2, kind: input, shape index: {}]
  %s3 = inlined_call_operand.hbm [shape: f32[256,256], index: 3, kind: input, shape index: {}]
  %s4 = inlined_call_operand.vmem [shape: f32[1,256], index: 4, kind: input, shape index: {}]
  %s5 = inlined_call_operand.hbm [shape: f32[4,256], index: 5, kind: output, shape index: {}]
  %s6 = sld [smem:[#allocation0]]
  $region42: #{tpu_custom_call.1} parent=0
    _
  %s8 = ssub.s32 1, %s6
  %s9 = scalar_select 0, %s8, %s6
  $region1: #{tpu_custom_call.1} parent=0
    #allocation2 [shape = 'u8[2048]{0}', space=vmem, size = 0x800, scoped, tag = 'input window, operand 0, single buffered']
    #allocation3 [shape = 's32[1]{0}', space=sflag, size = 0x4, scoped, tag = 'scoped memory for tpu_custom_call.1']
    #allocation4 [shape = 's32[1]{0}', space=sflag, size = 0x4, scoped, tag = 'scoped memory for tpu_custom_call.1']
    #allocation5 [shape = 'u8[24576]{0}', space=vmem, size = 0x6000, scoped, tag = 'input window, operand 1, single buffered']
    #allocation6 [shape = 's32[1]{0}', space=sflag, size = 0x4, scoped, tag = 'scoped memory for tpu_custom_call.1']
    #allocation7 [shape = 'u8[262144]{0}', space=vmem, size = 0x40000, scoped, tag = 'input window, operand 3, single buffered']
    #allocation8 [shape = 'u8[4096]{0}', space=vmem, size = 0x1000, scoped, tag = 'output window, operand 0, single buffered']
    %10 = vsyncpa [#allocation3], 0
    %11 = vsyncpa [#allocation6], 0
    %12 = vsyncpa [#allocation4], 0
    // Predicated region
    $region2: #{tpu_custom_call.1} parent=1 // pred_check
      _
    $region3: #{tpu_custom_call.1} parent=1 // pred_check_branch
      %14 = sbr.rel (0) target = $region5
    $region4: #{tpu_custom_call.1} parent=1 // pred_region
      %s16 = ssub.s32 64, 64
      %17 = vsyncadd [#allocation3], %s16
      %s19 = sshll.u32 [#allocation2], 4
      %s20 = int_to_ptr.vmem [resolvable:$true] %s19
      %22 = dma.hbm_to_vmem [thread:$0]  %s0, 64, %s20, [#allocation3]
    $region5: #{tpu_custom_call.1} parent=1 // pred_fallthru
      _
    // Predicated region
    $region6: #{tpu_custom_call.1} parent=1 // pred_check
      _
    $region7: #{tpu_custom_call.1} parent=1 // pred_check_branch
      %24 = sbr.rel (0) target = $region9
    $region8: #{tpu_custom_call.1} parent=1 // pred_region
      %s26 = ssub.s32 768, 768
      %27 = vsyncadd [#allocation6], %s26
      %s28 = sshll.u32 [#allocation5], 4
      %s29 = int_to_ptr.vmem [resolvable:$true] %s28
      %34 = dma.hbm_to_vmem [thread:$0]  %s1, 768, %s29, [#allocation6], 256, 256, 16
    $region9: #{tpu_custom_call.1} parent=1 // pred_fallthru
      _
    // Predicated region
    $region10: #{tpu_custom_call.1} parent=1 // pred_check
      _
    $region11: #{tpu_custom_call.1} parent=1 // pred_check_branch
      %36 = sbr.rel (0) target = $region13
    $region12: #{tpu_custom_call.1} parent=1 // pred_region
      _
    $region13: #{tpu_custom_call.1} parent=1 // pred_fallthru
      _
    // Predicated region
    $region14: #{tpu_custom_call.1} parent=1 // pred_check
      _
    $region15: #{tpu_custom_call.1} parent=1 // pred_check_branch
      %38 = sbr.rel (0) target = $region17
    $region16: #{tpu_custom_call.1} parent=1 // pred_region
      %s40 = ssub.s32 8192, 8192
      %41 = vsyncadd [#allocation6], %s40
      %s42 = sshll.u32 [#allocation7], 4
      %s43 = int_to_ptr.vmem [resolvable:$true] %s42
      %48 = dma.hbm_to_vmem [thread:$0]  %s3, 8192, %s43, [#allocation6], 256, 256, 16
    $region17: #{tpu_custom_call.1} parent=1 // pred_fallthru
      _
    // Predicated region
    $region18: #{tpu_custom_call.1} parent=1 // pred_check
      _
    $region19: #{tpu_custom_call.1} parent=1 // pred_check_branch
      %50 = sbr.rel (0) target = $region21
    $region20: #{tpu_custom_call.1} parent=1 // pred_region
      _
    $region21: #{tpu_custom_call.1} parent=1 // pred_fallthru
      _
    // Predicated region
    $region22: #{tpu_custom_call.1} parent=1 // pred_check
      _
    $region23: #{tpu_custom_call.1} parent=1 // pred_check_branch
      %52 = sbr.rel (0) target = $region25
    $region24: #{tpu_custom_call.1} parent=1 // pred_region
      %53 = dma.done [#allocation3], 64
    $region25: #{tpu_custom_call.1} parent=1 // pred_fallthru
      _
    // Predicated region
    $region26: #{tpu_custom_call.1} parent=1 // pred_check
      _
    $region27: #{tpu_custom_call.1} parent=1 // pred_check_branch
      %55 = sbr.rel (0) target = $region29
    $region28: #{tpu_custom_call.1} parent=1 // pred_region
      %56 = dma.done [#allocation6], 768
    $region29: #{tpu_custom_call.1} parent=1 // pred_fallthru
      _
    // Predicated region
    $region30: #{tpu_custom_call.1} parent=1 // pred_check
      _
    $region31: #{tpu_custom_call.1} parent=1 // pred_check_branch
      %58 = sbr.rel (0) target = $region33
    $region32: #{tpu_custom_call.1} parent=1 // pred_region
      %59 = dma.done [#allocation6], 8192
    $region33: #{tpu_custom_call.1} parent=1 // pred_fallthru
      _
    %v60 = vld [vmem:[#allocation2] sm:$0xf]
    %v61 = vld [vmem:[#allocation5] sm:$0xff]
    %v62 = vld [vmem:[#allocation5 + $0x8] sm:$0xff]
    %v63 = vld [vmem:[#allocation5 + $0x10] sm:$0xff]
    %v64 = vld [vmem:[#allocation5 + $0x18] sm:$0xff]
    %v65 = vld [vmem:[#allocation5 + $0x20] sm:$0xff]
    %v66 = vld [vmem:[#allocation5 + $0x28] sm:$0xff]
    %v67 = vld [vmem:[%s2] sm:$0x3]
    %v69 = vlaneseq
    %v70 = vshrl.u32 %v69, 7
    %v71 = vsub.s32 0, %v70
    %v72 = vrot.slane %v67, %v71
    %v73 = vlaneseq
    %v74 = vshrl.u32 %v73, 7
    %v75 = vsub.s32 1, %v74
    %v76 = vrot.slane %v67, %v75
    %vm79 = vcmask 195584
    %v81 = vsel %vm79, %v60, 0
    %83 = vmatprep.subr.mxu0 0.0
    %84 = vmatpush1.msra.mxu0 0.0
    %85 = vmatprep.subr.mxu0 0.0
    %86 = vmatpush1.msra.mxu0 0.0
    %87 = vmatprep.subr.mxu0 0.0
    %88 = vmatpush1.msra.mxu0 0.0
    %89 = vmatprep.subr.mxu0 0.0
    %90 = vmatpush1.msra.mxu0 0.0
    %91 = vmatprep.subr.mxu0 0.0
    %92 = vmatpush1.msra.mxu0 0.0
    %93 = vmatprep.subr.mxu0 0.0
    %94 = vmatpush1.msra.mxu0 0.0
    %95 = vmatprep.subr.mxu0 0.0
    %96 = vmatpush1.msra.mxu0 0.0
    %97 = vmatprep.subr.mxu0 0.0
    %98 = vmatpush1.msra.mxu0 0.0
    %99 = vmatprep.subr.mxu0 0.0
    %100 = vmatpush1.msra.mxu0 0.0
    %101 = vmatprep.subr.mxu0 0.0
    %102 = vmatpush1.msra.mxu0 0.0
    %103 = vmatprep.subr.mxu0 0.0
    %104 = vmatpush1.msra.mxu0 0.0
    %105 = vmatprep.subr.mxu0 0.0
    %106 = vmatpush1.msra.mxu0 0.0
    %107 = vmatprep.subr.mxu0 0.0
    %108 = vmatpush1.msra.mxu0 0.0
    %109 = vmatprep.subr.mxu0 %v66
    %110 = vmatpush1.msra.mxu0 %v65
    %111 = vmatprep.subr.mxu0 %v64
    %112 = vmatpush1.msra.mxu0 %v63
    %113 = vmatprep.subr.mxu0 %v62
    %114 = vmatpush1.msra.mxu0 %v61
    %115 = vmatprep.subr.mxu0 0.0
    %116 = vmatpush2.msra.mxu0 0.0
    %117 = vmatprep.subr.mxu0 0.0
    %118 = vmatpush2.msra.mxu0 0.0
    %119 = vmatprep.subr.mxu0 0.0
    %120 = vmatpush2.msra.mxu0 0.0
    %121 = vmatprep.subr.mxu0 0.0
    %122 = vmatpush2.msra.mxu0 0.0
    %123 = vmatprep.subr.mxu0 0.0
    %124 = vmatpush2.msra.mxu0 0.0
    %125 = vmatprep.subr.mxu0 0.0
    %126 = vmatpush2.msra.mxu0 0.0
    %127 = vmatprep.subr.mxu0 0.0
    %128 = vmatpush2.msra.mxu0 0.0
    %129 = vmatprep.subr.mxu0 0.0
    %130 = vmatpush2.msra.mxu0 0.0
    %131 = vmatprep.subr.mxu0 0.0
    %132 = vmatpush2.msra.mxu0 0.0
    %133 = vmatprep.subr.mxu0 0.0
    %134 = vmatpush2.msra.mxu0 0.0
    %135 = vmatprep.subr.mxu0 0.0
    %136 = vmatpush2.msra.mxu0 0.0
    %137 = vmatprep.subr.mxu0 0.0
    %138 = vmatpush2.msra.mxu0 0.0
    %139 = vmatprep.subr.mxu0 0.0
    %140 = vmatpush2.msra.mxu0 0.0
    %141 = vmatprep.subr.mxu0 0.0
    %142 = vmatpush2.msra.mxu0 0.0
    %143 = vmatprep.subr.mxu0 0.0
    %144 = vmatpush2.msra.mxu0 0.0
    %145 = vmatprep.subr.mxu0 0.0
    %146 = vmatpush2.msra.mxu0 0.0
    %147 = vmatprep.mubr.f32.mxu0 0.0
    %148 = vmatmul.mubr.f32.gmra.mxu0 %v81
    %v149 = vpop.f32.mrf.mxu0
    %v150 = vadd.f32 %v72, %v149
    %v151 = vpop.f32.mrf.mxu0
    %v152 = vadd.f32 %v76, %v151
    %153 = vdwg.mxu0
    %v154 = vmul.f32 %v150, 0.5
    %v155 = vmul.f32 %v152, 0.5
    %v156 = vmul.f32 %v150, 0.70710677
    %v157 = vmul.f32 %v152, 0.70710677
    %v158 = verf.f32.pop %v156
    %v159 = verf.f32.pop %v157
    %v160 = vadd.f32 %v158, 1.0
    %v161 = vadd.f32 %v159, 1.0
    %v162 = vmul.f32 %v154, %v160
    %v163 = vmul.f32 %v155, %v161
    %v164 = vld [vmem:[#allocation7] sm:$0xff]
    %v165 = vld [vmem:[#allocation7 + $0x8] sm:$0xff]
    %v166 = vld [vmem:[#allocation7 + $0x10] sm:$0xff]
    %v167 = vld [vmem:[#allocation7 + $0x18] sm:$0xff]
    %v168 = vld [vmem:[#allocation7 + $0x20] sm:$0xff]
    %v169 = vld [vmem:[#allocation7 + $0x28] sm:$0xff]
    %v170 = vld [vmem:[#allocation7 + $0x30] sm:$0xff]
    %v171 = vld [vmem:[#allocation7 + $0x38] sm:$0xff]
    %v172 = vld [vmem:[#allocation7 + $0x40] sm:$0xff]
    %v173 = vld [vmem:[#allocation7 + $0x48] sm:$0xff]
    %v174 = vld [vmem:[#allocation7 + $0x50] sm:$0xff]
    %v175 = vld [vmem:[#allocation7 + $0x58] sm:$0xff]
    %v176 = vld [vmem:[#allocation7 + $0x60] sm:$0xff]
    %v177 = vld [vmem:[#allocation7 + $0x68] sm:$0xff]
    %v178 = vld [vmem:[#allocation7 + $0x70] sm:$0xff]
    %v179 = vld [vmem:[#allocation7 + $0x78] sm:$0xff]
    %v180 = vld [vmem:[#allocation7 + $0x80] sm:$0xff]
    %v181 = vld [vmem:[#allocation7 + $0x88] sm:$0xff]
    %v182 = vld [vmem:[#allocation7 + $0x90] sm:$0xff]
    %v183 = vld [vmem:[#allocation7 + $0x98] sm:$0xff]
    %v184 = vld [vmem:[#allocation7 + $0xa0] sm:$0xff]
    %v185 = vld [vmem:[#allocation7 + $0xa8] sm:$0xff]
    %v186 = vld [vmem:[#allocation7 + $0xb0] sm:$0xff]
    %v187 = vld [vmem:[#allocation7 + $0xb8] sm:$0xff]
    %v188 = vld [vmem:[#allocation7 + $0xc0] sm:$0xff]
    %v189 = vld [vmem:[#allocation7 + $0xc8] sm:$0xff]
    %v190 = vld [vmem:[#allocation7 + $0xd0] sm:$0xff]
    %v191 = vld [vmem:[#allocation7 + $0xd8] sm:$0xff]
    %v192 = vld [vmem:[#allocation7 + $0xe0] sm:$0xff]
    %v193 = vld [vmem:[#allocation7 + $0xe8] sm:$0xff]
    %v194 = vld [vmem:[#allocation7 + $0xf0] sm:$0xff]
    %v195 = vld [vmem:[#allocation7 + $0xf8] sm:$0xff]
    %v196 = vld [vmem:[#allocation7 + $0x100] sm:$0xff]
    %v197 = vld [vmem:[#allocation7 + $0x108] sm:$0xff]
    %v198 = vld [vmem:[#allocation7 + $0x110] sm:$0xff]
    %v199 = vld [vmem:[#allocation7 + $0x118] sm:$0xff]
    %v200 = vld [vmem:[#allocation7 + $0x120] sm:$0xff]
    %v201 = vld [vmem:[#allocation7 + $0x128] sm:$0xff]
    %v202 = vld [vmem:[#allocation7 + $0x130] sm:$0xff]
    %v203 = vld [vmem:[#allocation7 + $0x138] sm:$0xff]
    %v204 = vld [vmem:[#allocation7 + $0x140] sm:$0xff]
    %v205 = vld [vmem:[#allocation7 + $0x148] sm:$0xff]
    %v206 = vld [vmem:[#allocation7 + $0x150] sm:$0xff]
    %v207 = vld [vmem:[#allocation7 + $0x158] sm:$0xff]
    %v208 = vld [vmem:[#allocation7 + $0x160] sm:$0xff]
    %v209 = vld [vmem:[#allocation7 + $0x168] sm:$0xff]
    %v210 = vld [vmem:[#allocation7 + $0x170] sm:$0xff]
    %v211 = vld [vmem:[#allocation7 + $0x178] sm:$0xff]
    %v212 = vld [vmem:[#allocation7 + $0x180] sm:$0xff]
    %v213 = vld [vmem:[#allocation7 + $0x188] sm:$0xff]
    %v214 = vld [vmem:[#allocation7 + $0x190] sm:$0xff]
    %v215 = vld [vmem:[#allocation7 + $0x198] sm:$0xff]
    %v216 = vld [vmem:[#allocation7 + $0x1a0] sm:$0xff]
    %v217 = vld [vmem:[#allocation7 + $0x1a8] sm:$0xff]
    %v218 = vld [vmem:[#allocation7 + $0x1b0] sm:$0xff]
    %v219 = vld [vmem:[#allocation7 + $0x1b8] sm:$0xff]
    %v220 = vld [vmem:[#allocation7 + $0x1c0] sm:$0xff]
    %v221 = vld [vmem:[#allocation7 + $0x1c8] sm:$0xff]
    %v222 = vld [vmem:[#allocation7 + $0x1d0] sm:$0xff]
    %v223 = vld [vmem:[#allocation7 + $0x1d8] sm:$0xff]
    %v224 = vld [vmem:[#allocation7 + $0x1e0] sm:$0xff]
    %v225 = vld [vmem:[#allocation7 + $0x1e8] sm:$0xff]
    %v226 = vld [vmem:[#allocation7 + $0x1f0] sm:$0xff]
    %v227 = vld [vmem:[#allocation7 + $0x1f8] sm:$0xff]
    %v228 = vld [vmem:[%s4] sm:$0x3]
    %v230 = vlaneseq
    %v231 = vshrl.u32 %v230, 7
    %v232 = vsub.s32 0, %v231
    %v233 = vrot.slane %v228, %v232
    %v234 = vlaneseq
    %v235 = vshrl.u32 %v234, 7
    %v236 = vsub.s32 1, %v235
    %v237 = vrot.slane %v228, %v236
    %240 = vmatprep.subr.mxu0 %v195
    %241 = vmatpush1.msra.mxu0 %v194
    %242 = vmatprep.subr.mxu0 %v193
    %243 = vmatpush1.msra.mxu0 %v192
    %244 = vmatprep.subr.mxu0 %v191
    %245 = vmatpush1.msra.mxu0 %v190
    %246 = vmatprep.subr.mxu0 %v189
    %247 = vmatpush1.msra.mxu0 %v188
    %248 = vmatprep.subr.mxu0 %v187
    %249 = vmatpush1.msra.mxu0 %v186
    %250 = vmatprep.subr.mxu0 %v185
    %251 = vmatpush1.msra.mxu0 %v184
    %252 = vmatprep.subr.mxu0 %v183
    %253 = vmatpush1.msra.mxu0 %v182
    %254 = vmatprep.subr.mxu0 %v181
    %255 = vmatpush1.msra.mxu0 %v180
    %256 = vmatprep.subr.mxu0 %v179
    %257 = vmatpush1.msra.mxu0 %v178
    %258 = vmatprep.subr.mxu0 %v177
    %259 = vmatpush1.msra.mxu0 %v176
    %260 = vmatprep.subr.mxu0 %v175
    %261 = vmatpush1.msra.mxu0 %v174
    %262 = vmatprep.subr.mxu0 %v173
    %263 = vmatpush1.msra.mxu0 %v172
    %264 = vmatprep.subr.mxu0 %v171
    %265 = vmatpush1.msra.mxu0 %v170
    %266 = vmatprep.subr.mxu0 %v169
    %267 = vmatpush1.msra.mxu0 %v168
    %268 = vmatprep.subr.mxu0 %v167
    %269 = vmatpush1.msra.mxu0 %v166
    %270 = vmatprep.subr.mxu0 %v165
    %271 = vmatpush1.msra.mxu0 %v164
    %272 = vmatprep.subr.mxu0 %v227
    %273 = vmatpush2.msra.mxu0 %v226
    %274 = vmatprep.subr.mxu0 %v225
    %275 = vmatpush2.msra.mxu0 %v224
    %276 = vmatprep.subr.mxu0 %v223
    %277 = vmatpush2.msra.mxu0 %v222
    %278 = vmatprep.subr.mxu0 %v221
    %279 = vmatpush2.msra.mxu0 %v220
    %280 = vmatprep.subr.mxu0 %v219
    %281 = vmatpush2.msra.mxu0 %v218
    %282 = vmatprep.subr.mxu0 %v217
    %283 = vmatpush2.msra.mxu0 %v216
    %284 = vmatprep.subr.mxu0 %v215
    %285 = vmatpush2.msra.mxu0 %v214
    %286 = vmatprep.subr.mxu0 %v213
    %287 = vmatpush2.msra.mxu0 %v212
    %288 = vmatprep.subr.mxu0 %v211
    %289 = vmatpush2.msra.mxu0 %v210
    %290 = vmatprep.subr.mxu0 %v209
    %291 = vmatpush2.msra.mxu0 %v208
    %292 = vmatprep.subr.mxu0 %v207
    %293 = vmatpush2.msra.mxu0 %v206
    %294 = vmatprep.subr.mxu0 %v205
    %295 = vmatpush2.msra.mxu0 %v204
    %296 = vmatprep.subr.mxu0 %v203
    %297 = vmatpush2.msra.mxu0 %v202
    %298 = vmatprep.subr.mxu0 %v201
    %299 = vmatpush2.msra.mxu0 %v200
    %300 = vmatprep.subr.mxu0 %v199
    %301 = vmatpush2.msra.mxu0 %v198
    %302 = vmatprep.subr.mxu0 %v197
    %303 = vmatpush2.msra.mxu0 %v196
    %304 = vmatprep.mubr.f32.mxu0 %v163
    %305 = vmatmul.mubr.f32.gmra.mxu0 %v162
    %v306 = vpop.f32.mrf.mxu0
    %v307 = vadd.f32 %v233, %v306
    %v308 = vpop.f32.mrf.mxu0
    %v309 = vadd.f32 %v237, %v308
    %310 = vdwg.mxu0
    %v313 = vcombine.low %v307, %v309
    %315 = vst [vmem:[#allocation8] sm:$0xff] %v313
    // Predicated region
    $region34: #{tpu_custom_call.1} parent=1 // pred_check
      _
    $region35: #{tpu_custom_call.1} parent=1 // pred_check_branch
      %317 = sbr.rel (0) target = $region37
    $region36: #{tpu_custom_call.1} parent=1 // pred_region
      %s319 = ssub.s32 128, 128
      %320 = vsyncadd [#allocation4], %s319
      %s322 = sshll.u32 [#allocation8], 4
      %s323 = int_to_ptr.vmem [resolvable:$true] %s322
      %325 = dma.vmem_to_hbm [thread:$0]  %s323, 128, %s5, [#allocation4]
    $region37: #{tpu_custom_call.1} parent=1 // pred_fallthru
      _
    // Predicated region
    $region38: #{tpu_custom_call.1} parent=1 // pred_check
      _
    $region39: #{tpu_custom_call.1} parent=1 // pred_check_branch
      %327 = sbr.rel (0) target = $region41
    $region40: #{tpu_custom_call.1} parent=1 // pred_region
      %328 = dma.done [#allocation4], 128
    $region41: #{tpu_custom_call.1} parent=1 // pred_fallthru
      _
    %329 = vsyncpa [#allocation3], 1
    %330 = vsyncpa [#allocation6], 1
    %331 = vsyncpa [#allocation4], 1

</llo_original>
